<compile_context>
chip_gen: v7x
topology: tpu7x:2x2x1
jax: 0.10.0
libtpu: 0.0.40
codegen_flags: <defaults>
</compile_context>

<pallas_src>
import functools

import jax
import jax.numpy as jnp
import numpy as np
from jax.experimental import pallas as pl
from jax.experimental.pallas import tpu as pltpu

LN_EPS = 1e-5  # torch.nn.LayerNorm default eps


def _norm(x):
    """LayerNorm normalization (no affine), f32 math."""
    mu = jnp.mean(x, axis=-1, keepdims=True)
    var = jnp.mean(jnp.square(x - mu), axis=-1, keepdims=True)
    return (x - mu) * jax.lax.rsqrt(var + LN_EPS)


def decoder_kernel(min_scale,
                   xl_ref, xg_ref,          # local (tile,H), global (tile,G)
                   w1l_ref, w1g_ref,        # fused first layer (pi | aggr)
                   w2_ref,                  # block-diag (2H,3H): pi stage-2 | loc s1 | scale s1
                   wout_ref,                # fused packed output heads (3H, out_pad)
                   p_ref,                   # stacked 1-D params (8, pw)
                   out_ref,                 # packed output (tile, out_pad)
                   loc_scr):                # VMEM scratch (tile, 2H) f32
    H = xl_ref.shape[1]
    OW = out_ref.shape[1]
    wdt = w2_ref.dtype  # matmul operand dtype (f32 or bf16)

    p = p_ref[...]                                   # f32
    b1, g1, be1 = p[0:1, :2 * H], p[1:2, :2 * H], p[2:3, :2 * H]
    b2, g2, be2 = p[3:4, :3 * H], p[4:5, :3 * H], p[5:6, :3 * H]
    b_out = p[6:7, :OW]
    scale_mask = p[7:8, :OW]                         # 1.0 on scale columns

    # Local first-layer contribution: computed once per node tile (mode == 0),
    # reused across all modes via VMEM scratch (no K-way replication).
    @pl.when(pl.program_id(1) == 0)
    def _():
        loc_scr[...] = jnp.dot(xl_ref[...], w1l_ref[...],
                               preferred_element_type=jnp.float32)

    # Fused first layer: cols [0:H] -> pi stage-1, cols [H:2H] -> aggr_embed.
    h0 = (jnp.dot(xg_ref[...], w1g_ref[...], preferred_element_type=jnp.float32)
          + loc_scr[...] + b1)
    h1 = jnp.concatenate([_norm(h0[:, :H]), _norm(h0[:, H:])], axis=1)
    h1 = jnp.maximum(h1 * g1 + be1, 0.0)             # [tile, 2H]

    # Block-diag stage 2: [pi stage-2 | loc stage-1 | scale stage-1] in one chain.
    h2 = jnp.dot(h1.astype(wdt), w2_ref[...], preferred_element_type=jnp.float32) + b2
    h3 = jnp.concatenate([_norm(h2[:, :H]), _norm(h2[:, H:2 * H]),
                          _norm(h2[:, 2 * H:])], axis=1)
    h3 = jnp.maximum(h3 * g2 + be2, 0.0)             # [tile, 3H]

    # Fused packed output heads: col 0 = pi, then (loc_t, scale_t) interleaved;
    # disjoint nonzero columns per head, padded to a lane-dense width.
    y = jnp.dot(h3.astype(wdt), wout_ref[...], preferred_element_type=jnp.float32) + b_out

    # ELU(alpha=1) + 1 + min_scale on scale columns only (safe exp).
    elu = jnp.where(y > 0, y, jnp.exp(jnp.minimum(y, 0.0)) - 1.0)
    out_ref[...] = jnp.where(scale_mask > 0.5, elu + (1.0 + min_scale), y)


def fuse_decoder_params(params, *, hidden, global_channels, future_steps, scale_dim,
                        matmul_dtype=jnp.float32):
    """One-time parameter fusion (call once, cache the result)."""
    H, G, F, sd = hidden, global_channels, future_steps, scale_dim
    out_w = 1 + F * (2 + sd)
    out_pad = ((out_w + 127) // 128) * 128           # lane-dense output width
    pw = max(3 * H, out_pad)

    # First layer: pi takes cat(local, global); aggr takes cat(global, local).
    w1_local = jnp.concatenate([params['pi_w1'][:H], params['ag_w1'][G:]], axis=1)   # (H, 2H)
    w1_global = jnp.concatenate([params['pi_w1'][H:], params['ag_w1'][:G]], axis=1)  # (G, 2H)

    # Block-diag stage 2: (2H, 3H) = [[pi_w2, 0, 0], [0, loc_w1, sc_w1]].
    w2 = jnp.zeros((2 * H, 3 * H), jnp.float32)
    w2 = w2.at[:H, :H].set(params['pi_w2'])
    w2 = w2.at[H:, H:2 * H].set(params['loc_w1'])
    w2 = w2.at[H:, 2 * H:].set(params['sc_w1'])

    # Packed output columns: [pi | (loc_t(2), scale_t(sd)) for t in 0..F-1], padded.
    loc_cols = np.array([1 + t * (2 + sd) + c for t in range(F) for c in range(2)])
    sc_cols = np.array([1 + t * (2 + sd) + 2 + c for t in range(F) for c in range(sd)])
    w_out = jnp.zeros((3 * H, out_pad), jnp.float32)
    w_out = w_out.at[:H, 0].set(params['pi_w3'][:, 0])
    w_out = w_out.at[H:2 * H, loc_cols].set(params['loc_w2'])
    w_out = w_out.at[2 * H:, sc_cols].set(params['sc_w2'])
    b_out = (jnp.zeros((out_pad,), jnp.float32)
             .at[0].set(params['pi_b3'][0])
             .at[loc_cols].set(params['loc_b2'])
             .at[sc_cols].set(params['sc_b2']))
    scale_mask = jnp.zeros((out_pad,), jnp.float32).at[sc_cols].set(1.0)

    def row(v):
        v = jnp.asarray(v, jnp.float32)
        return jnp.pad(v, (0, pw - v.shape[0]))

    p_mat = jnp.stack([
        row(jnp.concatenate([params['pi_b1'], params['ag_b1']])),                       # 0: b1
        row(jnp.concatenate([params['pi_g1'], params['ag_g1']])),                       # 1: g1
        row(jnp.concatenate([params['pi_be1'], params['ag_be1']])),                     # 2: be1
        row(jnp.concatenate([params['pi_b2'], params['loc_b1'], params['sc_b1']])),     # 3: b2
        row(jnp.concatenate([params['pi_g2'], params['loc_g1'], params['sc_g1']])),     # 4: g2
        row(jnp.concatenate([params['pi_be2'], params['loc_be1'], params['sc_be1']])),  # 5: be2
        row(b_out),                                                                     # 6
        row(scale_mask),                                                                # 7
    ])                                               # (8, pw) — one DMA descriptor

    mm = lambda w: w.astype(matmul_dtype)
    return dict(w1_local=mm(w1_local), w1_global=mm(w1_global), w2=mm(w2),
                w_out=mm(w_out), p_mat=p_mat)


def mlp_decoder_forward(local_embed, global_embed, fused, *,
                        future_steps, num_modes, min_scale=1e-3, scale_dim=2,
                        node_tile=None):
    N, H = local_embed.shape
    K, N2, G = global_embed.shape
    assert K == num_modes and N2 == N
    # TODO(synk): pad the node axis if N is not a multiple of 8.
    assert N % 8 == 0, "number of nodes must be a multiple of 8"
    F, sd = future_steps, scale_dim
    out_w = 1 + F * (2 + sd)
    out_pad = fused['w_out'].shape[1]
    M = K * N

    if node_tile is None:                            # largest multiple-of-8 divisor <= 512
        node_tile = min(N, 512)
        while N % node_tile:
            node_tile -= 8
    assert node_tile % 8 == 0 and N % node_tile == 0
    NT = N // node_tile

    mdt = fused['w1_local'].dtype                    # matmul operand dtype
    xl = local_embed.astype(mdt)                     # [N, H]
    xg = global_embed.reshape(M, G).astype(mdt)      # [M, G], mode-major rows

    w1l, w1g, w2, w_out, p_mat = (fused['w1_local'], fused['w1_global'],
                                  fused['w2'], fused['w_out'], fused['p_mat'])

    def const_spec(a):                               # weights stay VMEM-resident
        return pl.BlockSpec(a.shape, lambda n, k: (0,) * a.ndim)

    in_specs = [
        pl.BlockSpec((node_tile, H), lambda n, k: (n, 0)),            # local: per node tile
        pl.BlockSpec((node_tile, G), lambda n, k: (k * NT + n, 0)),   # global: per (mode, tile)
        const_spec(w1l), const_spec(w1g), const_spec(w2),
        const_spec(w_out), const_spec(p_mat),
    ]
    out_spec = pl.BlockSpec((node_tile, out_pad), lambda n, k: (k * NT + n, 0))

    # Rough VMEM budget (double-buffered tiles + resident weights + scratch).
    isz = np.dtype(mdt).itemsize
    tile_bytes = 2 * (node_tile * H * isz + node_tile * G * isz + node_tile * out_pad * 4)
    weight_bytes = 2 * sum(int(np.prod(a.shape)) * a.dtype.itemsize
                           for a in (w1l, w1g, w2, w_out, p_mat))
    scratch_bytes = node_tile * 2 * H * 4
    vmem_limit = int(min(32 << 20,
                         max(16 << 20, 4 * (tile_bytes + weight_bytes + scratch_bytes))))

    kernel = functools.partial(decoder_kernel, float(min_scale))
    packed = pl.pallas_call(
        kernel,
        out_shape=jax.ShapeDtypeStruct((M, out_pad), jnp.float32),
        grid=(NT, K),                                # node tiles (parallel) x modes (arbitrary)
        in_specs=in_specs,
        out_specs=out_spec,
        scratch_shapes=[pltpu.VMEM((node_tile, 2 * H), jnp.float32)],
        compiler_params=pltpu.CompilerParams(
            dimension_semantics=("parallel", "arbitrary"),
            vmem_limit_bytes=vmem_limit),
    )(xl, xg, w1l, w1g, w2, w_out, p_mat)

    pi = packed[:, 0].reshape(K, N).T                       # [N, K]
    loc_scale = packed[:, 1:out_w].reshape(K, N, F, 2 + sd)  # [K, N, F, 2+sd]
    return loc_scale, pi


def init_params(key, H, G, F, scale_dim):
    keys = jax.random.split(key, 8)

    def lin(k, din, dout):
        kw, kb = jax.random.split(k)
        w = jax.random.normal(kw, (din, dout), jnp.float32) / np.sqrt(din)
        b = jax.random.normal(kb, (dout,), jnp.float32) * 0.1
        return w, b

    ones = lambda: jnp.ones((H,), jnp.float32)
    zeros = lambda: jnp.zeros((H,), jnp.float32)
    p = {}
    p['pi_w1'], p['pi_b1'] = lin(keys[0], H + G, H)
    p['pi_g1'], p['pi_be1'] = ones(), zeros()
    p['pi_w2'], p['pi_b2'] = lin(keys[1], H, H)
    p['pi_g2'], p['pi_be2'] = ones(), zeros()
    p['pi_w3'], p['pi_b3'] = lin(keys[2], H, 1)
    p['ag_w1'], p['ag_b1'] = lin(keys[3], G + H, H)
    p['ag_g1'], p['ag_be1'] = ones(), zeros()
    p['loc_w1'], p['loc_b1'] = lin(keys[4], H, H)
    p['loc_g1'], p['loc_be1'] = ones(), zeros()
    p['loc_w2'], p['loc_b2'] = lin(keys[5], H, F * 2)
    p['sc_w1'], p['sc_b1'] = lin(keys[6], H, H)
    p['sc_g1'], p['sc_be1'] = ones(), zeros()
    p['sc_w2'], p['sc_b2'] = lin(keys[7], H, F * scale_dim)
    return p


def reference(local_embed, global_embed, params, future_steps, num_modes,
              min_scale, scale_dim):
    N, H = local_embed.shape
    xl = jnp.broadcast_to(local_embed[None], (num_modes, N, H))
    xg = global_embed

    def ln(x, g, b):
        mu = jnp.mean(x, -1, keepdims=True)
        var = jnp.mean((x - mu) ** 2, -1, keepdims=True)
        return (x - mu) * jax.lax.rsqrt(var + LN_EPS) * g + b

    x = jnp.concatenate([xl, xg], -1)
    h = jnp.maximum(ln(x @ params['pi_w1'] + params['pi_b1'], params['pi_g1'], params['pi_be1']), 0.)
    h = jnp.maximum(ln(h @ params['pi_w2'] + params['pi_b2'], params['pi_g2'], params['pi_be2']), 0.)
    pi = (h @ params['pi_w3'] + params['pi_b3'])[..., 0].T

    x = jnp.concatenate([xg, xl], -1)
    out = jnp.maximum(ln(x @ params['ag_w1'] + params['ag_b1'], params['ag_g1'], params['ag_be1']), 0.)

    hl = jnp.maximum(ln(out @ params['loc_w1'] + params['loc_b1'], params['loc_g1'], params['loc_be1']), 0.)
    loc = (hl @ params['loc_w2'] + params['loc_b2']).reshape(num_modes, N, future_steps, 2)

    hs = jnp.maximum(ln(out @ params['sc_w1'] + params['sc_b1'], params['sc_g1'], params['sc_be1']), 0.)
    s = hs @ params['sc_w2'] + params['sc_b2']
    s = jnp.where(s > 0, s, jnp.exp(jnp.minimum(s, 0.0)) - 1.0) + 1.0 + min_scale
    scale = s.reshape(num_modes, N, future_steps, scale_dim)
    return jnp.concatenate([loc, scale], -1), pi


if __name__ == "__main__":
    # small config: local_channels=32, global_channels=16, future_steps=8, num_modes=6, N=16 agents
    N, H, G, F, K = 16, 32, 16, 8, 6
    SCALE_DIM, MIN_SCALE = 2, 1e-3

    key = jax.random.PRNGKey(0)
    k1, k2, kp = jax.random.split(key, 3)
    local_embed = jax.random.normal(k1, (N, H), jnp.float32)
    global_embed = jax.random.normal(k2, (K, N, G), jnp.float32)
    params = init_params(kp, H, G, F, SCALE_DIM)

    ref_ls, ref_pi = reference(local_embed, global_embed, params, F, K,
                               MIN_SCALE, SCALE_DIM)

    # --- f32 matmul-operand path (validation / v5e) ---
    fused_f32 = fuse_decoder_params(params, hidden=H, global_channels=G,
                                    future_steps=F, scale_dim=SCALE_DIM,
                                    matmul_dtype=jnp.float32)
    loc_scale, pi = mlp_decoder_forward(local_embed, global_embed, fused_f32,
                                        future_steps=F, num_modes=K,
                                        min_scale=MIN_SCALE, scale_dim=SCALE_DIM,
                                        node_tile=8)
    jax.block_until_ready((loc_scale, pi))
    assert loc_scale.shape == (K, N, F, 2 + SCALE_DIM)
    assert pi.shape == (N, K)
    np.testing.assert_allclose(np.asarray(loc_scale), np.asarray(ref_ls), rtol=2e-2, atol=2e-2)
    np.testing.assert_allclose(np.asarray(pi), np.asarray(ref_pi), rtol=2e-2, atol=2e-2)

    # --- bf16 matmul-operand path (v6e / v7x MXU fast path; LN/ELU math stays f32) ---
    fused_bf16 = fuse_decoder_params(params, hidden=H, global_channels=G,
                                     future_steps=F, scale_dim=SCALE_DIM,
                                     matmul_dtype=jnp.bfloat16)
    ls_bf, pi_bf = mlp_decoder_forward(local_embed, global_embed, fused_bf16,
                                       future_steps=F, num_modes=K,
                                       min_scale=MIN_SCALE, scale_dim=SCALE_DIM,
                                       node_tile=8)
    jax.block_until_ready((ls_bf, pi_bf))
    np.testing.assert_allclose(np.asarray(ls_bf), np.asarray(ref_ls), rtol=1e-1, atol=1e-1)
    np.testing.assert_allclose(np.asarray(pi_bf), np.asarray(ref_pi), rtol=1e-1, atol=1e-1)

    print("KERNEL_OK")
</pallas_src>

<mosaic_0001>
module attributes {stable_mosaic.version = 11 : i64} {
  func.func @decoder_kernel(%arg0: i32, %arg1: i32, %arg2: memref<8x32xf32, #tpu.memory_space<vmem>>, %arg3: memref<8x16xf32, #tpu.memory_space<vmem>>, %arg4: memref<32x64xf32, #tpu.memory_space<vmem>>, %arg5: memref<16x64xf32, #tpu.memory_space<vmem>>, %arg6: memref<64x96xf32, #tpu.memory_space<vmem>>, %arg7: memref<96x128xf32, #tpu.memory_space<vmem>>, %arg8: memref<8x128xf32, #tpu.memory_space<vmem>>, %arg9: memref<8x128xf32, #tpu.memory_space<vmem>>, %arg10: memref<8x64xf32, #tpu.memory_space<vmem>>) attributes {dimension_semantics = [#tpu.dimension_semantics<parallel>, #tpu.dimension_semantics<arbitrary>], iteration_bounds = array<i64: 2, 6>, scalar_prefetch = 0 : i64, scratch_operands = 1 : i64, tpu.core_type = #tpu.core_type<tc>, window_params = [{transform_indices = @transform_0, window_bounds = array<i64: 8, 32>}, {transform_indices = @transform_1, window_bounds = array<i64: 8, 16>}, {pipeline_mode = #tpu.pipeline_mode<synchronous>, transform_indices = @transform_2, window_bounds = array<i64: 32, 64>}, {pipeline_mode = #tpu.pipeline_mode<synchronous>, transform_indices = @transform_3, window_bounds = array<i64: 16, 64>}, {pipeline_mode = #tpu.pipeline_mode<synchronous>, transform_indices = @transform_4, window_bounds = array<i64: 64, 96>}, {pipeline_mode = #tpu.pipeline_mode<synchronous>, transform_indices = @transform_5, window_bounds = array<i64: 96, 128>}, {pipeline_mode = #tpu.pipeline_mode<synchronous>, transform_indices = @transform_6, window_bounds = array<i64: 8, 128>}, {transform_indices = @transform_7, window_bounds = array<i64: 8, 128>}]} {
    %c0 = arith.constant 0 : index
    %c0_0 = arith.constant 0 : index
    %0 = vector.load %arg8[%c0, %c0_0] : memref<8x128xf32, #tpu.memory_space<vmem>>, vector<8x128xf32>
    %1 = vector.extract_strided_slice %0 {offsets = [0, 0], sizes = [1, 64], strides = [1, 1]} : vector<8x128xf32> to vector<1x64xf32>
    %2 = vector.extract_strided_slice %0 {offsets = [1, 0], sizes = [1, 64], strides = [1, 1]} : vector<8x128xf32> to vector<1x64xf32>
    %3 = vector.extract_strided_slice %0 {offsets = [2, 0], sizes = [1, 64], strides = [1, 1]} : vector<8x128xf32> to vector<1x64xf32>
    %4 = vector.extract_strided_slice %0 {offsets = [3, 0], sizes = [1, 96], strides = [1, 1]} : vector<8x128xf32> to vector<1x96xf32>
    %5 = vector.extract_strided_slice %0 {offsets = [4, 0], sizes = [1, 96], strides = [1, 1]} : vector<8x128xf32> to vector<1x96xf32>
    %6 = vector.extract_strided_slice %0 {offsets = [5, 0], sizes = [1, 96], strides = [1, 1]} : vector<8x128xf32> to vector<1x96xf32>
    %7 = vector.extract_strided_slice %0 {offsets = [6, 0], sizes = [1, 128], strides = [1, 1]} : vector<8x128xf32> to vector<1x128xf32>
    %8 = vector.extract_strided_slice %0 {offsets = [7, 0], sizes = [1, 128], strides = [1, 1]} : vector<8x128xf32> to vector<1x128xf32>
    %c0_i32 = arith.constant 0 : i32
    %9 = arith.cmpi eq, %arg1, %c0_i32 : i32
    %10 = arith.extui %9 : i1 to i32
    %c0_i32_1 = arith.constant 0 : i32
    %11 = arith.cmpi ne, %10, %c0_i32_1 : i32
    scf.if %11 {
      %c0_48 = arith.constant 0 : index
      %c0_49 = arith.constant 0 : index
      %152 = vector.load %arg2[%c0_48, %c0_49] : memref<8x32xf32, #tpu.memory_space<vmem>>, vector<8x32xf32>
      %c0_50 = arith.constant 0 : index
      %c0_51 = arith.constant 0 : index
      %153 = vector.load %arg4[%c0_50, %c0_51] : memref<32x64xf32, #tpu.memory_space<vmem>>, vector<32x64xf32>
      %cst_52 = arith.constant dense<0.000000e+00> : vector<8x64xf32>
      %154 = tpu.matmul %152, %153, %cst_52 {dimension_numbers = #tpu.dot_dimension_numbers<[1], [0], [0], [1], [0, 0, 1, 1], [], []>} : vector<8x32xf32>, vector<32x64xf32>, vector<8x64xf32> -> vector<8x64xf32>
      %c0_53 = arith.constant 0 : index
      %c0_54 = arith.constant 0 : index
      %155 = vector.load %arg10[%c0_53, %c0_54] : memref<8x64xf32, #tpu.memory_space<vmem>>, vector<8x64xf32>
      tpu.vector_store %arg10[%c0_53, %c0_54], %154 {strides = array<i32>} : memref<8x64xf32, #tpu.memory_space<vmem>>, vector<8x64xf32>,
    } else {
    }
    %c0_2 = arith.constant 0 : index
    %c0_3 = arith.constant 0 : index
    %12 = vector.load %arg3[%c0_2, %c0_3] : memref<8x16xf32, #tpu.memory_space<vmem>>, vector<8x16xf32>
    %c0_4 = arith.constant 0 : index
    %c0_5 = arith.constant 0 : index
    %13 = vector.load %arg5[%c0_4, %c0_5] : memref<16x64xf32, #tpu.memory_space<vmem>>, vector<16x64xf32>
    %cst = arith.constant dense<0.000000e+00> : vector<8x64xf32>
    %14 = tpu.matmul %12, %13, %cst {dimension_numbers = #tpu.dot_dimension_numbers<[1], [0], [0], [1], [0, 0, 1, 1], [], []>} : vector<8x16xf32>, vector<16x64xf32>, vector<8x64xf32> -> vector<8x64xf32>
    %c0_6 = arith.constant 0 : index
    %c0_7 = arith.constant 0 : index
    %15 = vector.load %arg10[%c0_6, %c0_7] : memref<8x64xf32, #tpu.memory_space<vmem>>, vector<8x64xf32>
    %16 = arith.addf %14, %15 : vector<8x64xf32>
    %17 = vector.broadcast %1 : vector<1x64xf32> to vector<8x64xf32>
    %18 = arith.addf %16, %17 : vector<8x64xf32>
    %19 = vector.extract_strided_slice %18 {offsets = [0, 0], sizes = [8, 32], strides = [1, 1]} : vector<8x64xf32> to vector<8x32xf32>
    %cst_8 = arith.constant dense<0.000000e+00> : vector<8xf32>
    %20 = vector.multi_reduction <add>, %19, %cst_8 [1] : vector<8x32xf32> to vector<8xf32>
    %21 = vector.shape_cast %20 : vector<8xf32> to vector<8x1xf32>
    %cst_9 = arith.constant 3.200000e+01 : f32
    %22 = vector.broadcast %cst_9 : f32 to vector<8x1xf32>
    %23 = arith.divf %21, %22 : vector<8x1xf32>
    %24 = vector.broadcast %23 : vector<8x1xf32> to vector<8x32xf32>
    %25 = arith.subf %19, %24 : vector<8x32xf32>
    %26 = arith.mulf %25, %25 : vector<8x32xf32>
    %cst_10 = arith.constant dense<0.000000e+00> : vector<8xf32>
    %27 = vector.multi_reduction <add>, %26, %cst_10 [1] : vector<8x32xf32> to vector<8xf32>
    %28 = vector.shape_cast %27 : vector<8xf32> to vector<8x1xf32>
    %cst_11 = arith.constant 3.200000e+01 : f32
    %29 = vector.broadcast %cst_11 : f32 to vector<8x1xf32>
    %30 = arith.divf %28, %29 : vector<8x1xf32>
    %31 = vector.broadcast %23 : vector<8x1xf32> to vector<8x32xf32>
    %32 = arith.subf %19, %31 : vector<8x32xf32>
    %cst_12 = arith.constant 9.99999974E-6 : f32
    %33 = vector.broadcast %cst_12 : f32 to vector<8x1xf32>
    %34 = arith.addf %30, %33 : vector<8x1xf32>
    %35 = math.rsqrt %34 : vector<8x1xf32>
    %36 = vector.broadcast %35 : vector<8x1xf32> to vector<8x32xf32>
    %37 = arith.mulf %32, %36 : vector<8x32xf32>
    %38 = vector.extract_strided_slice %18 {offsets = [0, 32], sizes = [8, 32], strides = [1, 1]} : vector<8x64xf32> to vector<8x32xf32>
    %cst_13 = arith.constant dense<0.000000e+00> : vector<8xf32>
    %39 = vector.multi_reduction <add>, %38, %cst_13 [1] : vector<8x32xf32> to vector<8xf32>
    %40 = vector.shape_cast %39 : vector<8xf32> to vector<8x1xf32>
    %cst_14 = arith.constant 3.200000e+01 : f32
    %41 = vector.broadcast %cst_14 : f32 to vector<8x1xf32>
    %42 = arith.divf %40, %41 : vector<8x1xf32>
    %43 = vector.broadcast %42 : vector<8x1xf32> to vector<8x32xf32>
    %44 = arith.subf %38, %43 : vector<8x32xf32>
    %45 = arith.mulf %44, %44 : vector<8x32xf32>
    %cst_15 = arith.constant dense<0.000000e+00> : vector<8xf32>
    %46 = vector.multi_reduction <add>, %45, %cst_15 [1] : vector<8x32xf32> to vector<8xf32>
    %47 = vector.shape_cast %46 : vector<8xf32> to vector<8x1xf32>
    %cst_16 = arith.constant 3.200000e+01 : f32
    %48 = vector.broadcast %cst_16 : f32 to vector<8x1xf32>
    %49 = arith.divf %47, %48 : vector<8x1xf32>
    %50 = vector.broadcast %42 : vector<8x1xf32> to vector<8x32xf32>
    %51 = arith.subf %38, %50 : vector<8x32xf32>
    %cst_17 = arith.constant 9.99999974E-6 : f32
    %52 = vector.broadcast %cst_17 : f32 to vector<8x1xf32>
    %53 = arith.addf %49, %52 : vector<8x1xf32>
    %54 = math.rsqrt %53 : vector<8x1xf32>
    %55 = vector.broadcast %54 : vector<8x1xf32> to vector<8x32xf32>
    %56 = arith.mulf %51, %55 : vector<8x32xf32>
    %57 = tpu.concatenate %37, %56 in 1 : vector<8x32xf32>, vector<8x32xf32> -> vector<8x64xf32>
    %58 = vector.broadcast %2 : vector<1x64xf32> to vector<8x64xf32>
    %59 = arith.mulf %57, %58 : vector<8x64xf32>
    %60 = vector.broadcast %3 : vector<1x64xf32> to vector<8x64xf32>
    %61 = arith.addf %59, %60 : vector<8x64xf32>
    %cst_18 = arith.constant 0.000000e+00 : f32
    %62 = vector.broadcast %cst_18 : f32 to vector<8x64xf32>
    %63 = arith.maximumf %61, %62 : vector<8x64xf32>
    %c0_19 = arith.constant 0 : index
    %c0_20 = arith.constant 0 : index
    %64 = vector.load %arg6[%c0_19, %c0_20] : memref<64x96xf32, #tpu.memory_space<vmem>>, vector<64x96xf32>
    %cst_21 = arith.constant dense<0.000000e+00> : vector<8x96xf32>
    %65 = tpu.matmul %63, %64, %cst_21 {dimension_numbers = #tpu.dot_dimension_numbers<[1], [0], [0], [1], [0, 0, 1, 1], [], []>} : vector<8x64xf32>, vector<64x96xf32>, vector<8x96xf32> -> vector<8x96xf32>
    %66 = vector.broadcast %4 : vector<1x96xf32> to vector<8x96xf32>
    %67 = arith.addf %65, %66 : vector<8x96xf32>
    %68 = vector.extract_strided_slice %67 {offsets = [0, 0], sizes = [8, 32], strides = [1, 1]} : vector<8x96xf32> to vector<8x32xf32>
    %cst_22 = arith.constant dense<0.000000e+00> : vector<8xf32>
    %69 = vector.multi_reduction <add>, %68, %cst_22 [1] : vector<8x32xf32> to vector<8xf32>
    %70 = vector.shape_cast %69 : vector<8xf32> to vector<8x1xf32>
    %cst_23 = arith.constant 3.200000e+01 : f32
    %71 = vector.broadcast %cst_23 : f32 to vector<8x1xf32>
    %72 = arith.divf %70, %71 : vector<8x1xf32>
    %73 = vector.broadcast %72 : vector<8x1xf32> to vector<8x32xf32>
    %74 = arith.subf %68, %73 : vector<8x32xf32>
    %75 = arith.mulf %74, %74 : vector<8x32xf32>
    %cst_24 = arith.constant dense<0.000000e+00> : vector<8xf32>
    %76 = vector.multi_reduction <add>, %75, %cst_24 [1] : vector<8x32xf32> to vector<8xf32>
    %77 = vector.shape_cast %76 : vector<8xf32> to vector<8x1xf32>
    %cst_25 = arith.constant 3.200000e+01 : f32
    %78 = vector.broadcast %cst_25 : f32 to vector<8x1xf32>
    %79 = arith.divf %77, %78 : vector<8x1xf32>
    %80 = vector.broadcast %72 : vector<8x1xf32> to vector<8x32xf32>
    %81 = arith.subf %68, %80 : vector<8x32xf32>
    %cst_26 = arith.constant 9.99999974E-6 : f32
    %82 = vector.broadcast %cst_26 : f32 to vector<8x1xf32>
    %83 = arith.addf %79, %82 : vector<8x1xf32>
    %84 = math.rsqrt %83 : vector<8x1xf32>
    %85 = vector.broadcast %84 : vector<8x1xf32> to vector<8x32xf32>
    %86 = arith.mulf %81, %85 : vector<8x32xf32>
    %87 = vector.extract_strided_slice %67 {offsets = [0, 32], sizes = [8, 32], strides = [1, 1]} : vector<8x96xf32> to vector<8x32xf32>
    %cst_27 = arith.constant dense<0.000000e+00> : vector<8xf32>
    %88 = vector.multi_reduction <add>, %87, %cst_27 [1] : vector<8x32xf32> to vector<8xf32>
    %89 = vector.shape_cast %88 : vector<8xf32> to vector<8x1xf32>
    %cst_28 = arith.constant 3.200000e+01 : f32
    %90 = vector.broadcast %cst_28 : f32 to vector<8x1xf32>
    %91 = arith.divf %89, %90 : vector<8x1xf32>
    %92 = vector.broadcast %91 : vector<8x1xf32> to vector<8x32xf32>
    %93 = arith.subf %87, %92 : vector<8x32xf32>
    %94 = arith.mulf %93, %93 : vector<8x32xf32>
    %cst_29 = arith.constant dense<0.000000e+00> : vector<8xf32>
    %95 = vector.multi_reduction <add>, %94, %cst_29 [1] : vector<8x32xf32> to vector<8xf32>
    %96 = vector.shape_cast %95 : vector<8xf32> to vector<8x1xf32>
    %cst_30 = arith.constant 3.200000e+01 : f32
    %97 = vector.broadcast %cst_30 : f32 to vector<8x1xf32>
    %98 = arith.divf %96, %97 : vector<8x1xf32>
    %99 = vector.broadcast %91 : vector<8x1xf32> to vector<8x32xf32>
    %100 = arith.subf %87, %99 : vector<8x32xf32>
    %cst_31 = arith.constant 9.99999974E-6 : f32
    %101 = vector.broadcast %cst_31 : f32 to vector<8x1xf32>
    %102 = arith.addf %98, %101 : vector<8x1xf32>
    %103 = math.rsqrt %102 : vector<8x1xf32>
    %104 = vector.broadcast %103 : vector<8x1xf32> to vector<8x32xf32>
    %105 = arith.mulf %100, %104 : vector<8x32xf32>
    %106 = vector.extract_strided_slice %67 {offsets = [0, 64], sizes = [8, 32], strides = [1, 1]} : vector<8x96xf32> to vector<8x32xf32>
    %cst_32 = arith.constant dense<0.000000e+00> : vector<8xf32>
    %107 = vector.multi_reduction <add>, %106, %cst_32 [1] : vector<8x32xf32> to vector<8xf32>
    %108 = vector.shape_cast %107 : vector<8xf32> to vector<8x1xf32>
    %cst_33 = arith.constant 3.200000e+01 : f32
    %109 = vector.broadcast %cst_33 : f32 to vector<8x1xf32>
    %110 = arith.divf %108, %109 : vector<8x1xf32>
    %111 = vector.broadcast %110 : vector<8x1xf32> to vector<8x32xf32>
    %112 = arith.subf %106, %111 : vector<8x32xf32>
    %113 = arith.mulf %112, %112 : vector<8x32xf32>
    %cst_34 = arith.constant dense<0.000000e+00> : vector<8xf32>
    %114 = vector.multi_reduction <add>, %113, %cst_34 [1] : vector<8x32xf32> to vector<8xf32>
    %115 = vector.shape_cast %114 : vector<8xf32> to vector<8x1xf32>
    %cst_35 = arith.constant 3.200000e+01 : f32
    %116 = vector.broadcast %cst_35 : f32 to vector<8x1xf32>
    %117 = arith.divf %115, %116 : vector<8x1xf32>
    %118 = vector.broadcast %110 : vector<8x1xf32> to vector<8x32xf32>
    %119 = arith.subf %106, %118 : vector<8x32xf32>
    %cst_36 = arith.constant 9.99999974E-6 : f32
    %120 = vector.broadcast %cst_36 : f32 to vector<8x1xf32>
    %121 = arith.addf %117, %120 : vector<8x1xf32>
    %122 = math.rsqrt %121 : vector<8x1xf32>
    %123 = vector.broadcast %122 : vector<8x1xf32> to vector<8x32xf32>
    %124 = arith.mulf %119, %123 : vector<8x32xf32>
    %125 = tpu.concatenate %86, %105, %124 in 1 : vector<8x32xf32>, vector<8x32xf32>, vector<8x32xf32> -> vector<8x96xf32>
    %126 = vector.broadcast %5 : vector<1x96xf32> to vector<8x96xf32>
    %127 = arith.mulf %125, %126 : vector<8x96xf32>
    %128 = vector.broadcast %6 : vector<1x96xf32> to vector<8x96xf32>
    %129 = arith.addf %127, %128 : vector<8x96xf32>
    %cst_37 = arith.constant 0.000000e+00 : f32
    %130 = vector.broadcast %cst_37 : f32 to vector<8x96xf32>
    %131 = arith.maximumf %129, %130 : vector<8x96xf32>
    %c0_38 = arith.constant 0 : index
    %c0_39 = arith.constant 0 : index
    %132 = vector.load %arg7[%c0_38, %c0_39] : memref<96x128xf32, #tpu.memory_space<vmem>>, vector<96x128xf32>
    %cst_40 = arith.constant dense<0.000000e+00> : vector<8x128xf32>
    %133 = tpu.matmul %131, %132, %cst_40 {dimension_numbers = #tpu.dot_dimension_numbers<[1], [0], [0], [1], [0, 0, 1, 1], [], []>} : vector<8x96xf32>, vector<96x128xf32>, vector<8x128xf32> -> vector<8x128xf32>
    %134 = vector.broadcast %7 : vector<1x128xf32> to vector<8x128xf32>
    %135 = arith.addf %133, %134 : vector<8x128xf32>
    %cst_41 = arith.constant 0.000000e+00 : f32
    %136 = vector.broadcast %cst_41 : f32 to vector<8x128xf32>
    %137 = arith.cmpf ogt, %135, %136 : vector<8x128xf32>
    %cst_42 = arith.constant 0.000000e+00 : f32
    %138 = vector.broadcast %cst_42 : f32 to vector<8x128xf32>
    %139 = arith.minimumf %135, %138 : vector<8x128xf32>
    %140 = math.exp %139 : vector<8x128xf32>
    %cst_43 = arith.constant 1.000000e+00 : f32
    %141 = vector.broadcast %cst_43 : f32 to vector<8x128xf32>
    %142 = arith.subf %140, %141 : vector<8x128xf32>
    %143 = arith.select %137, %135, %142 : vector<8x128xi1>, vector<8x128xf32>
    %cst_44 = arith.constant 5.000000e-01 : f32
    %144 = vector.broadcast %cst_44 : f32 to vector<1x128xf32>
    %145 = arith.cmpf ogt, %8, %144 : vector<1x128xf32>
    %cst_45 = arith.constant 1.001000e+00 : f32
    %146 = vector.broadcast %cst_45 : f32 to vector<8x128xf32>
    %147 = arith.addf %143, %146 : vector<8x128xf32>
    %148 = vector.shape_cast %145 : vector<1x128xi1> to vector<1x128xi1>
    %149 = vector.broadcast %148 : vector<1x128xi1> to vector<8x128xi1>
    %150 = arith.select %149, %147, %135 : vector<8x128xi1>, vector<8x128xf32>
    %c0_46 = arith.constant 0 : index
    %c0_47 = arith.constant 0 : index
    %151 = vector.load %arg9[%c0_46, %c0_47] : memref<8x128xf32, #tpu.memory_space<vmem>>, vector<8x128xf32>
    tpu.vector_store %arg9[%c0_46, %c0_47], %150 {strides = array<i32>} : memref<8x128xf32, #tpu.memory_space<vmem>>, vector<8x128xf32>,
    return
  }
  func.func @transform_0(%arg0: i32, %arg1: i32) -> (i32, i32) {
    %c0_i32 = arith.constant 0 : i32
    %c0_i32_0 = arith.constant 0 : i32
    return %arg0, %c0_i32 : i32, i32
  }
  func.func @transform_1(%arg0: i32, %arg1: i32) -> (i32, i32) {
    %c2_i32 = arith.constant 2 : i32
    %0 = arith.muli %arg1, %c2_i32 : i32
    %1 = arith.addi %0, %arg0 : i32
    %c0_i32 = arith.constant 0 : i32
    %c0_i32_0 = arith.constant 0 : i32
    return %1, %c0_i32 : i32, i32
  }
  func.func @transform_2(%arg0: i32, %arg1: i32) -> (i32, i32) {
    %c0_i32 = arith.constant 0 : i32
    %c0_i32_0 = arith.constant 0 : i32
    %c0_i32_1 = arith.constant 0 : i32
    return %c0_i32, %c0_i32_0 : i32, i32
  }
  func.func @transform_3(%arg0: i32, %arg1: i32) -> (i32, i32) {
    %c0_i32 = arith.constant 0 : i32
    %c0_i32_0 = arith.constant 0 : i32
    %c0_i32_1 = arith.constant 0 : i32
    return %c0_i32, %c0_i32_0 : i32, i32
  }
  func.func @transform_4(%arg0: i32, %arg1: i32) -> (i32, i32) {
    %c0_i32 = arith.constant 0 : i32
    %c0_i32_0 = arith.constant 0 : i32
    %c0_i32_1 = arith.constant 0 : i32
    return %c0_i32, %c0_i32_0 : i32, i32
  }
  func.func @transform_5(%arg0: i32, %arg1: i32) -> (i32, i32) {
    %c0_i32 = arith.constant 0 : i32
    %c0_i32_0 = arith.constant 0 : i32
    %c0_i32_1 = arith.constant 0 : i32
    return %c0_i32, %c0_i32_0 : i32, i32
  }
  func.func @transform_6(%arg0: i32, %arg1: i32) -> (i32, i32) {
    %c0_i32 = arith.constant 0 : i32
    %c0_i32_0 = arith.constant 0 : i32
    %c0_i32_1 = arith.constant 0 : i32
    return %c0_i32, %c0_i32_0 : i32, i32
  }
  func.func @transform_7(%arg0: i32, %arg1: i32) -> (i32, i32) {
    %c2_i32 = arith.constant 2 : i32
    %0 = arith.muli %arg1, %c2_i32 : i32
    %1 = arith.addi %0, %arg0 : i32
    %c0_i32 = arith.constant 0 : i32
    %c0_i32_0 = arith.constant 0 : i32
    return %1, %c0_i32 : i32, i32
  }
}

</mosaic_0001>

<llo_original>
// kernel: tpu_custom_call.1
$region0: #{tpu_custom_call.1}
  #allocation0 [shape = 'u32[]', space=smem, size = 0x4, offset = 0x4, fixed_abs, tag = 'smem constant byte address 0x4 - core index']
  #allocation1 [shape = 'u32[144,128]{1,0:T(1,128)}', space=vmem, size = 0x12000, scoped, tag = 'internal scratch']
  #allocation2 [shape = 'f32[8,64]{1,0:T(8,128)}', space=vmem, size = 0x1000, scoped, tag = 'scratch operand']
  %s0 = inlined_call_operand.hbm [shape: f32[16,32], index: 0, kind: input, shape index: {}]
  %s1 = inlined_call_operand.vmem [shape: f32[96,16], index: 1, kind: input, shape index: {}]
  %s2 = inlined_call_operand.vmem [shape: f32[32,64], index: 2, kind: input, shape index: {}]
  %s3 = inlined_call_operand.hbm [shape: f32[16,64], index: 3, kind: input, shape index: {}]
  %s4 = inlined_call_operand.hbm [shape: f32[64,96], index: 4, kind: input, shape index: {}]
  %s5 = inlined_call_operand.vmem [shape: f32[96,128], index: 5, kind: input, shape index: {}]
  %s6 = inlined_call_operand.hbm [shape: f32[8,128], index: 6, kind: input, shape index: {}]
  %s7 = inlined_call_operand.hbm [shape: f32[96,128], index: 7, kind: output, shape index: {}]
  %s8 = sld [smem:[#allocation0]]
  $region81: #{tpu_custom_call.1} parent=0
    _
  %s10 = ssub.s32 1, %s8
  %s11 = scalar_select 0, %s10, %s8
  $region1: #{tpu_custom_call.1} parent=0
    #allocation3 [shape = 'u8[8192]{0}', space=vmem, size = 0x2000, scoped, tag = 'input window, operand 0']
    #allocation4 [shape = 's32[2]{0}', space=sflag, size = 0x8, scoped, tag = 'scoped memory for tpu_custom_call.1']
    #allocation5 [shape = 's32[2]{0}', space=sflag, size = 0x8, scoped, tag = 'scoped memory for tpu_custom_call.1']
    #allocation6 [shape = 'u8[8192]{0}', space=vmem, size = 0x2000, scoped, tag = 'input window, operand 3, single buffered']
    #allocation7 [shape = 's32[1]{0}', space=sflag, size = 0x4, scoped, tag = 'scoped memory for tpu_custom_call.1']
    #allocation8 [shape = 'u8[32768]{0}', space=vmem, size = 0x8000, scoped, tag = 'input window, operand 4, single buffered']
    #allocation9 [shape = 'u8[4096]{0}', space=vmem, size = 0x1000, scoped, tag = 'input window, operand 6, single buffered']
    #allocation10 [shape = 's32[1]{0}', space=sflag, size = 0x4, scoped, tag = 'scoped memory for tpu_custom_call.1']
    #allocation11 [shape = 'u8[8192]{0}', space=vmem, size = 0x2000, scoped, tag = 'output window, operand 0']
    %12 = vsyncpa [#allocation4], 0
    %s13 = scalar_lea.sflag [#allocation4], 1
    %14 = vsyncpa %s13, 0
    %15 = vsyncpa [#allocation7], 0
    %16 = vsyncpa [#allocation10], 0
    %17 = vsyncpa [#allocation5], 0
    %s18 = scalar_lea.sflag [#allocation5], 1
    %19 = vsyncpa %s18, 0
    loop: start=0, step=1, limit=14
    $region2: #{tpu_custom_call.1} parent=1 // loop_pre_header
      _
    $region3: #{tpu_custom_call.1} parent=1 // loop_header
      %s21 = sphi 0, %s25
      %p22 = scmp.ge.s32.totalorder %s21, 14
      %s28 = sphi 0, %s40
      %s29 = sphi 0, %s36
      %s30 = sphi 0, %s28
      %s31 = sphi 0, %s29
      %s32 = sphi 0, %s30
      %s33 = sphi 0, %s31
      %s43 = sphi 0, %s45
      %s46 = sphi 0, %s43
      %s47 = sphi 0, %s46
      %s63 = sphi 0, %s47
      %s73 = sphi 0, %s75
      %s76 = sphi 0, %s73
      %s77 = sphi 0, %s76
      %s93 = sphi 0, %s77
      %s97 = sphi 0, %s97
      %s99 = sphi 0, %s97
      %s100 = sphi 0, %s99
      %s114 = sphi 0, %s100
      %s118 = sphi 0, %s118
      %s120 = sphi 0, %s118
      %s121 = sphi 0, %s120
      %s135 = sphi 0, %s121
      %s139 = sphi 0, %s139
      %s141 = sphi 0, %s139
      %s142 = sphi 0, %s141
      %s156 = sphi 0, %s142
      %s160 = sphi 0, %s160
      %s162 = sphi 0, %s160
      %s163 = sphi 0, %s162
      %s177 = sphi 0, %s163
      %s181 = sphi 0, %s181
      %s183 = sphi 0, %s181
      %s184 = sphi 0, %s183
      %s198 = sphi 0, %s184
      %s208 = sphi 0, %s210
      %s211 = sphi 0, %s208
      %s212 = sphi 0, %s211
      %s228 = sphi 0, %s212
    $region4: #{tpu_custom_call.1} parent=1 // loop_header_branch
      %24 = sbr.rel (%p22) target = $region8
    $region5: #{tpu_custom_call.1} parent=1 // loop_body
      %s26 = ssub.s32 %s21, 1
      %s27 = ssub.s32 %s21, 2
      %s34 = sadd.s32 1, %s29
      %p35 = scmp.ge.s32.totalorder %s34, 6
      %s36 = scalar_select %p35, 0, %s34
      %s37 = sadd.s32 1, %s28
      %s38 = scalar_select %p35, %s37, %s28
      %p39 = scmp.ge.s32.totalorder %s38, 2
      %s40 = scalar_select %p39, 0, %s38
      %s41 = ssub.s32 %s28, %s40
      %p42 = scmp.eq.s32.totalorder %s41, 0
      %s44 = sadd.s32 %s43, 1
      %s45 = scalar_select %p42, %s43, %s44
      %p48 = pneg %p42
      %p49 = scmp.eq.s32.totalorder %s21, 11
      %p50 = por %p48, %p49
      %p51 = scmp.ne.s32.totalorder %s43, %s46
      %p52 = scmp.eq.s32.totalorder %s21, 0
      %p53 = por %p51, %p52
      %p54 = scmp.ne.s32.totalorder %s43, %s46
      %p55 = scmp.eq.s32.totalorder %s26, 11
      %p56 = por %p54, %p55
      %p57 = scmp.ne.s32.totalorder %s46, %s47
      %p58 = scmp.eq.s32.totalorder %s26, 0
      %p59 = por %p57, %p58
      %p60 = scmp.ne.s32.totalorder %s46, %s47
      %p61 = scmp.eq.s32.totalorder %s27, 11
      %p62 = por %p60, %p61
      %p64 = scmp.ne.s32.totalorder %s47, %s63
      %p65 = scmp.eq.s32.totalorder %s27, 0
      %p66 = por %p64, %p65
      %s67 = smul.u32 %s29, 2
      %s68 = sadd.s32 %s67, %s28
      %s69 = smul.u32 %s36, 2
      %s70 = sadd.s32 %s69, %s40
      %s71 = ssub.s32 %s68, %s70
      %p72 = scmp.eq.s32.totalorder %s71, 0
      %s74 = sadd.s32 %s73, 1
      %s75 = scalar_select %p72, %s73, %s74
      %p78 = pneg %p72
      %p79 = scmp.eq.s32.totalorder %s21, 11
      %p80 = por %p78, %p79
      %p81 = scmp.ne.s32.totalorder %s73, %s76
      %p82 = scmp.eq.s32.totalorder %s21, 0
      %p83 = por %p81, %p82
      %p84 = scmp.ne.s32.totalorder %s73, %s76
      %p85 = scmp.eq.s32.totalorder %s26, 11
      %p86 = por %p84, %p85
      %p87 = scmp.ne.s32.totalorder %s76, %s77
      %p88 = scmp.eq.s32.totalorder %s26, 0
      %p89 = por %p87, %p88
      %p90 = scmp.ne.s32.totalorder %s76, %s77
      %p91 = scmp.eq.s32.totalorder %s27, 11
      %p92 = por %p90, %p91
      %p94 = scmp.ne.s32.totalorder %s77, %s93
      %p95 = scmp.eq.s32.totalorder %s27, 0
      %p96 = por %p94, %p95
      %s98 = sadd.s32 %s97, 1
      %p101 = scmp.eq.s32.totalorder %s21, 11
      %p102 = scmp.ne.s32.totalorder %s97, %s99
      %p103 = scmp.eq.s32.totalorder %s21, 0
      %p104 = por %p102, %p103
      %p105 = scmp.ne.s32.totalorder %s97, %s99
      %p106 = scmp.eq.s32.totalorder %s26, 11
      %p107 = por %p105, %p106
      %p108 = scmp.ne.s32.totalorder %s99, %s100
      %p109 = scmp.eq.s32.totalorder %s26, 0
      %p110 = por %p108, %p109
      %p111 = scmp.ne.s32.totalorder %s99, %s100
      %p112 = scmp.eq.s32.totalorder %s27, 11
      %p113 = por %p111, %p112
      %p115 = scmp.ne.s32.totalorder %s100, %s114
      %p116 = scmp.eq.s32.totalorder %s27, 0
      %p117 = por %p115, %p116
      %s119 = sadd.s32 %s118, 1
      %p122 = scmp.eq.s32.totalorder %s21, 11
      %p123 = scmp.ne.s32.totalorder %s118, %s120
      %p124 = scmp.eq.s32.totalorder %s21, 0
      %p125 = por %p123, %p124
      %p126 = scmp.ne.s32.totalorder %s118, %s120
      %p127 = scmp.eq.s32.totalorder %s26, 11
      %p128 = por %p126, %p127
      %p129 = scmp.ne.s32.totalorder %s120, %s121
      %p130 = scmp.eq.s32.totalorder %s26, 0
      %p131 = por %p129, %p130
      %p132 = scmp.ne.s32.totalorder %s120, %s121
      %p133 = scmp.eq.s32.totalorder %s27, 11
      %p134 = por %p132, %p133
      %p136 = scmp.ne.s32.totalorder %s121, %s135
      %p137 = scmp.eq.s32.totalorder %s27, 0
      %p138 = por %p136, %p137
      %s140 = sadd.s32 %s139, 1
      %p143 = scmp.eq.s32.totalorder %s21, 11
      %p144 = scmp.ne.s32.totalorder %s139, %s141
      %p145 = scmp.eq.s32.totalorder %s21, 0
      %p146 = por %p144, %p145
      %p147 = scmp.ne.s32.totalorder %s139, %s141
      %p148 = scmp.eq.s32.totalorder %s26, 11
      %p149 = por %p147, %p148
      %p150 = scmp.ne.s32.totalorder %s141, %s142
      %p151 = scmp.eq.s32.totalorder %s26, 0
      %p152 = por %p150, %p151
      %p153 = scmp.ne.s32.totalorder %s141, %s142
      %p154 = scmp.eq.s32.totalorder %s27, 11
      %p155 = por %p153, %p154
      %p157 = scmp.ne.s32.totalorder %s142, %s156
      %p158 = scmp.eq.s32.totalorder %s27, 0
      %p159 = por %p157, %p158
      %s161 = sadd.s32 %s160, 1
      %p164 = scmp.eq.s32.totalorder %s21, 11
      %p165 = scmp.ne.s32.totalorder %s160, %s162
      %p166 = scmp.eq.s32.totalorder %s21, 0
      %p167 = por %p165, %p166
      %p168 = scmp.ne.s32.totalorder %s160, %s162
      %p169 = scmp.eq.s32.totalorder %s26, 11
      %p170 = por %p168, %p169
      %p171 = scmp.ne.s32.totalorder %s162, %s163
      %p172 = scmp.eq.s32.totalorder %s26, 0
      %p173 = por %p171, %p172
      %p174 = scmp.ne.s32.totalorder %s162, %s163
      %p175 = scmp.eq.s32.totalorder %s27, 11
      %p176 = por %p174, %p175
      %p178 = scmp.ne.s32.totalorder %s163, %s177
      %p179 = scmp.eq.s32.totalorder %s27, 0
      %p180 = por %p178, %p179
      %s182 = sadd.s32 %s181, 1
      %p185 = scmp.eq.s32.totalorder %s21, 11
      %p186 = scmp.ne.s32.totalorder %s181, %s183
      %p187 = scmp.eq.s32.totalorder %s21, 0
      %p188 = por %p186, %p187
      %p189 = scmp.ne.s32.totalorder %s181, %s183
      %p190 = scmp.eq.s32.totalorder %s26, 11
      %p191 = por %p189, %p190
      %p192 = scmp.ne.s32.totalorder %s183, %s184
      %p193 = scmp.eq.s32.totalorder %s26, 0
      %p194 = por %p192, %p193
      %p195 = scmp.ne.s32.totalorder %s183, %s184
      %p196 = scmp.eq.s32.totalorder %s27, 11
      %p197 = por %p195, %p196
      %p199 = scmp.ne.s32.totalorder %s184, %s198
      %p200 = scmp.eq.s32.totalorder %s27, 0
      %p201 = por %p199, %p200
      %s202 = smul.u32 %s29, 2
      %s203 = sadd.s32 %s202, %s28
      %s204 = smul.u32 %s36, 2
      %s205 = sadd.s32 %s204, %s40
      %s206 = ssub.s32 %s203, %s205
      %p207 = scmp.eq.s32.totalorder %s206, 0
      %s209 = sadd.s32 %s208, 1
      %s210 = scalar_select %p207, %s208, %s209
      %p213 = pneg %p207
      %p214 = scmp.eq.s32.totalorder %s21, 11
      %p215 = por %p213, %p214
      %p216 = scmp.ne.s32.totalorder %s208, %s211
      %p217 = scmp.eq.s32.totalorder %s21, 0
      %p218 = por %p216, %p217
      %p219 = scmp.ne.s32.totalorder %s208, %s211
      %p220 = scmp.eq.s32.totalorder %s26, 11
      %p221 = por %p219, %p220
      %p222 = scmp.ne.s32.totalorder %s211, %s212
      %p223 = scmp.eq.s32.totalorder %s26, 0
      %p224 = por %p222, %p223
      %p225 = scmp.ne.s32.totalorder %s211, %s212
      %p226 = scmp.eq.s32.totalorder %s27, 11
      %p227 = por %p225, %p226
      %p229 = scmp.ne.s32.totalorder %s212, %s228
      %p230 = scmp.eq.s32.totalorder %s27, 0
      %p231 = por %p229, %p230
      %p232 = scmp.le.s32.totalorder 1, %s21
      %p233 = scmp.lt.s32.totalorder %s21, 13
      %p234 = pnand %p232, %p233
      %p235 = pneg %p234
      // Predicated region
      $region9: #{tpu_custom_call.1} parent=5 // pred_check
        _
      $region10: #{tpu_custom_call.1} parent=5 // pred_check_branch
        %237 = sbr.rel (%p234) target = $region12
      $region11: #{tpu_custom_call.1} parent=5 // pred_region
        %s238 = ssub.s32 %s21, 1
        // Predicated region
        $region13: #{tpu_custom_call.1} parent=11 // pred_check
          %p239 = pneg %p110
        $region14: #{tpu_custom_call.1} parent=11 // pred_check_branch
          %241 = sbr.rel (%p239) target = $region16
        $region15: #{tpu_custom_call.1} parent=11 // pred_region
          _
        $region16: #{tpu_custom_call.1} parent=11 // pred_fallthru
          _
        // Predicated region
        $region17: #{tpu_custom_call.1} parent=11 // pred_check
          %p242 = pneg %p131
        $region18: #{tpu_custom_call.1} parent=11 // pred_check_branch
          %244 = sbr.rel (%p242) target = $region20
        $region19: #{tpu_custom_call.1} parent=11 // pred_region
          %s246 = ssub.s32 256, 256
          %247 = vsyncadd [#allocation7], %s246
          %s248 = sshll.u32 [#allocation6], 4
          %s249 = int_to_ptr.vmem [resolvable:$true] %s248
          %254 = dma.hbm_to_vmem [thread:$0]  %s3, 256, %s249, [#allocation7], 128, 128, 8
        $region20: #{tpu_custom_call.1} parent=11 // pred_fallthru
          _
        // Predicated region
        $region21: #{tpu_custom_call.1} parent=11 // pred_check
          %p255 = pneg %p152
        $region22: #{tpu_custom_call.1} parent=11 // pred_check_branch
          %257 = sbr.rel (%p255) target = $region24
        $region23: #{tpu_custom_call.1} parent=11 // pred_region
          %s259 = ssub.s32 1024, 1024
          %260 = vsyncadd [#allocation7], %s259
          %s261 = sshll.u32 [#allocation8], 4
          %s262 = int_to_ptr.vmem [resolvable:$true] %s261
          %267 = dma.hbm_to_vmem [thread:$0]  %s4, 1024, %s262, [#allocation7], 128, 128, 8
        $region24: #{tpu_custom_call.1} parent=11 // pred_fallthru
          _
        // Predicated region
        $region25: #{tpu_custom_call.1} parent=11 // pred_check
          %p268 = pneg %p173
        $region26: #{tpu_custom_call.1} parent=11 // pred_check_branch
          %270 = sbr.rel (%p268) target = $region28
        $region27: #{tpu_custom_call.1} parent=11 // pred_region
          _
        $region28: #{tpu_custom_call.1} parent=11 // pred_fallthru
          _
        // Predicated region
        $region29: #{tpu_custom_call.1} parent=11 // pred_check
          %p271 = pneg %p194
        $region30: #{tpu_custom_call.1} parent=11 // pred_check_branch
          %273 = sbr.rel (%p271) target = $region32
        $region31: #{tpu_custom_call.1} parent=11 // pred_region
          %s275 = ssub.s32 128, 128
          %276 = vsyncadd [#allocation10], %s275
          %s278 = sshll.u32 [#allocation9], 4
          %s279 = int_to_ptr.vmem [resolvable:$true] %s278
          %281 = dma.hbm_to_vmem [thread:$0]  %s6, 128, %s279, [#allocation10]
        $region32: #{tpu_custom_call.1} parent=11 // pred_fallthru
          _
      $region12: #{tpu_custom_call.1} parent=5 // pred_fallthru
        _
      %p282 = scmp.lt.s32.totalorder %s21, 12
      // Predicated region
      $region33: #{tpu_custom_call.1} parent=5 // pred_check
        %p283 = pneg %p282
      $region34: #{tpu_custom_call.1} parent=5 // pred_check_branch
        %285 = sbr.rel (%p283) target = $region36
      $region35: #{tpu_custom_call.1} parent=5 // pred_region
        // Predicated region
        $region37: #{tpu_custom_call.1} parent=35 // pred_check
          %p286 = pneg %p53
        $region38: #{tpu_custom_call.1} parent=35 // pred_check_branch
          %288 = sbr.rel (%p286) target = $region40
        $region39: #{tpu_custom_call.1} parent=35 // pred_region
          %s289 = sand.u32 %s43, 1
          %s290 = scalar_lea.sflag [#allocation4], %s289
          %s291 = sand.u32 %s43, 1
          %s292 = smul.addr %s291, 8
          %s293 = scalar_lea.vmem [#allocation3], %s292
          %s295 = ssub.s32 128, 128
          %296 = vsyncadd %s290, %s295
          %s297 = smul.addr %s28, 128
          %s298 = scalar_lea.hbm %s0, %s297
          %s300 = sshll.u32 %s293, 4
          %s301 = int_to_ptr.vmem [resolvable:$true] %s300
          %303 = dma.hbm_to_vmem [thread:$0]  %s298, 128, %s301, %s290
        $region40: #{tpu_custom_call.1} parent=35 // pred_fallthru
          _
        // Predicated region
        $region41: #{tpu_custom_call.1} parent=35 // pred_check
          %p304 = pneg %p83
        $region42: #{tpu_custom_call.1} parent=35 // pred_check_branch
          %306 = sbr.rel (%p304) target = $region44
        $region43: #{tpu_custom_call.1} parent=35 // pred_region
          %s307 = smul.u32 %s29, 2
          %s308 = sadd.s32 %s307, %s28
          %p309 = scmp.lt.s32.totalorder %s308, 11
          %s310 = scalar_select %p309, %s308, 11
          %s311 = smul.addr %s310, 8
          %s312 = scalar_lea.vmem %s1, %s311
          %s313 = smul.u32 %s29, 2
          %s314 = sadd.s32 %s313, %s28
        $region44: #{tpu_custom_call.1} parent=35 // pred_fallthru
          _
      $region36: #{tpu_custom_call.1} parent=5 // pred_fallthru
        _
      %p315 = scmp.le.s32.totalorder 1, %s21
      %p316 = scmp.lt.s32.totalorder %s21, 13
      %p317 = pnand %p315, %p316
      %p318 = pneg %p317
      // Predicated region
      $region45: #{tpu_custom_call.1} parent=5 // pred_check
        _
      $region46: #{tpu_custom_call.1} parent=5 // pred_check_branch
        %320 = sbr.rel (%p317) target = $region48
      $region47: #{tpu_custom_call.1} parent=5 // pred_region
        %s321 = ssub.s32 %s21, 1
        %s322 = sand.u32 %s46, 1
        %s323 = scalar_lea.sflag [#allocation4], %s322
        %s324 = sand.u32 %s46, 1
        %s325 = smul.addr %s324, 8
        %s326 = scalar_lea.vmem [#allocation3], %s325
        // Predicated region
        $region49: #{tpu_custom_call.1} parent=47 // pred_check
          %p327 = pneg %p59
        $region50: #{tpu_custom_call.1} parent=47 // pred_check_branch
          %329 = sbr.rel (%p327) target = $region52
        $region51: #{tpu_custom_call.1} parent=47 // pred_region
          %330 = dma.done %s323, 128
        $region52: #{tpu_custom_call.1} parent=47 // pred_fallthru
          _
        // Predicated region
        $region53: #{tpu_custom_call.1} parent=47 // pred_check
          %p331 = pneg %p131
        $region54: #{tpu_custom_call.1} parent=47 // pred_check_branch
          %333 = sbr.rel (%p331) target = $region56
        $region55: #{tpu_custom_call.1} parent=47 // pred_region
          %334 = dma.done [#allocation7], 256
        $region56: #{tpu_custom_call.1} parent=47 // pred_fallthru
          _
        // Predicated region
        $region57: #{tpu_custom_call.1} parent=47 // pred_check
          %p335 = pneg %p152
        $region58: #{tpu_custom_call.1} parent=47 // pred_check_branch
          %337 = sbr.rel (%p335) target = $region60
        $region59: #{tpu_custom_call.1} parent=47 // pred_region
          %338 = dma.done [#allocation7], 1024
        $region60: #{tpu_custom_call.1} parent=47 // pred_fallthru
          _
        // Predicated region
        $region61: #{tpu_custom_call.1} parent=47 // pred_check
          %p339 = pneg %p194
        $region62: #{tpu_custom_call.1} parent=47 // pred_check_branch
          %341 = sbr.rel (%p339) target = $region64
        $region63: #{tpu_custom_call.1} parent=47 // pred_region
          %342 = dma.done [#allocation10], 128
        $region64: #{tpu_custom_call.1} parent=47 // pred_fallthru
          _
        %s343 = sand.u32 %s46, 1
        %s344 = scalar_lea.sflag [#allocation4], %s343
        %s345 = sand.u32 %s46, 1
        %s346 = smul.addr %s345, 8
        %s347 = scalar_lea.vmem [#allocation3], %s346
        %p348 = pneg %p59
        %p349 = pneg %p56
        %s350 = smul.u32 %s31, 2
        %s351 = sadd.s32 %s350, %s30
        %p352 = scmp.lt.s32.totalorder %s351, 11
        %s353 = scalar_select %p352, %s351, 11
        %s354 = smul.addr %s353, 8
        %s355 = scalar_lea.vmem %s1, %s354
        %p356 = pneg %p89
        %p357 = pneg %p86
        %p358 = pneg %p110
        %p359 = pneg %p107
        %p360 = pneg %p131
        %p361 = pneg %p128
        %p362 = pneg %p152
        %p363 = pneg %p149
        %p364 = pneg %p173
        %p365 = pneg %p170
        %p366 = pneg %p194
        %p367 = pneg %p191
        %p368 = pneg %p224
        %p369 = pneg %p221
        %s370 = sand.u32 %s211, 1
        %s371 = scalar_lea.sflag [#allocation5], %s370
        %s372 = sand.u32 %s211, 1
        %s373 = smul.addr %s372, 8
        %s374 = scalar_lea.vmem [#allocation11], %s373
        %s375 = smul.u32 %s31, 2
        %s376 = sadd.s32 %s375, %s30
        %p377 = scmp.lt.s32.totalorder %s376, 11
        %s378 = scalar_select %p377, %s376, 11
        %s379 = smul.addr %s378, 8
        %s380 = scalar_lea.vmem %s1, %s379
        %s381 = smul.u32 %s31, 2
        %s382 = sadd.s32 %s381, %s30
        %s383 = smul.u32 %s31, 2
        %s384 = sadd.s32 %s383, %s30
        %v385 = vld [vmem:[#allocation9] sm:$0xff]
        %p386 = scmp.eq.s32.totalorder %s31, 0
        // Predicated region
        $region65: #{tpu_custom_call.1} parent=47 // pred_check
          %p387 = pneg %p386
        $region66: #{tpu_custom_call.1} parent=47 // pred_check_branch
          %389 = sbr.rel (%p387) target = $region68
        $region67: #{tpu_custom_call.1} parent=47 // pred_region
          %v390 = vld [vmem:[%s326] sm:$0xff]
          %v391 = vld [vmem:[%s2] sm:$0xff]
          %v392 = vld [vmem:[%s2 + $0x8] sm:$0xff]
          %v393 = vld [vmem:[%s2 + $0x10] sm:$0xff]
          %v394 = vld [vmem:[%s2 + $0x18] sm:$0xff]
          %vm395 = vcmask 261120
          %v397 = vsel %vm395, %v390, 0
          %399 = vmatprep.subr.mxu0 0.0
          %400 = vmatpush1.msra.mxu0 %v391
          %401 = vmatprep.subr.mxu0 0.0
          %402 = vmatpush1.msra.mxu0 %v392
          %403 = vmatprep.subr.mxu0 0.0
          %404 = vmatpush1.msra.mxu0 %v393
          %405 = vmatprep.subr.mxu0 0.0
          %406 = vmatpush1.msra.mxu0 %v394
          %407 = vmatprep.subr.mxu0 0.0
          %408 = vmatpush1.msra.mxu0 0.0
          %409 = vmatprep.subr.mxu0 0.0
          %410 = vmatpush1.msra.mxu0 0.0
          %411 = vmatprep.subr.mxu0 0.0
          %412 = vmatpush1.msra.mxu0 0.0
          %413 = vmatprep.subr.mxu0 0.0
          %414 = vmatpush1.msra.mxu0 0.0
          %415 = vmatprep.subr.mxu0 0.0
          %416 = vmatpush1.msra.mxu0 0.0
          %417 = vmatprep.subr.mxu0 0.0
          %418 = vmatpush1.msra.mxu0 0.0
          %419 = vmatprep.subr.mxu0 0.0
          %420 = vmatpush1.msra.mxu0 0.0
          %421 = vmatprep.subr.mxu0 0.0
          %422 = vmatpush1.msra.mxu0 0.0
          %423 = vmatprep.subr.mxu0 0.0
          %424 = vmatpush1.msra.mxu0 0.0
          %425 = vmatprep.subr.mxu0 0.0
          %426 = vmatpush1.msra.mxu0 0.0
          %427 = vmatprep.subr.mxu0 0.0
          %428 = vmatpush1.msra.mxu0 0.0
          %429 = vmatprep.subr.mxu0 0.0
          %430 = vmatpush1.msra.mxu0 0.0
          %431 = vmatprep.subr.mxu0 0.0
          %432 = vmatpush1.msra.mxu0 0.0
          %433 = vmatprep.subr.mxu0 0.0
          %434 = vmatpush1.msra.mxu0 0.0
          %435 = vmatprep.subr.mxu0 0.0
          %436 = vmatpush1.msra.mxu0 0.0
          %437 = vmatprep.subr.mxu0 0.0
          %438 = vmatpush1.msra.mxu0 0.0
          %439 = vmatprep.subr.mxu0 0.0
          %440 = vmatpush1.msra.mxu0 0.0
          %441 = vmatprep.subr.mxu0 0.0
          %442 = vmatpush1.msra.mxu0 0.0
          %443 = vmatprep.subr.mxu0 0.0
          %444 = vmatpush1.msra.mxu0 0.0
          %445 = vmatprep.subr.mxu0 0.0
          %446 = vmatpush1.msra.mxu0 0.0
          %447 = vmatprep.subr.mxu0 0.0
          %448 = vmatpush1.msra.mxu0 0.0
          %449 = vmatprep.subr.mxu0 0.0
          %450 = vmatpush1.msra.mxu0 0.0
          %451 = vmatprep.subr.mxu0 0.0
          %452 = vmatpush1.msra.mxu0 0.0
          %453 = vmatprep.subr.mxu0 0.0
          %454 = vmatpush1.msra.mxu0 0.0
          %455 = vmatprep.subr.mxu0 0.0
          %456 = vmatpush1.msra.mxu0 0.0
          %457 = vmatprep.subr.mxu0 0.0
          %458 = vmatpush1.msra.mxu0 0.0
          %459 = vmatprep.subr.mxu0 0.0
          %460 = vmatpush1.msra.mxu0 0.0
          %461 = vmatprep.subr.mxu0 0.0
          %462 = vmatpush1.msra.mxu0 0.0
          %463 = vmatprep.mubr.f32.mxu0 0.0
          %464 = vmatmul.mubr.f32.gmra.mrb[0].mxu0 %v397
          %v465 = vpop.f32.mrb[0].mxu0
          %v466 = vadd.f32 0.0, %v465
          %v467 = vpop.f32.mrb[0].mxu0
          %468 = vdwg.mxu0
          %vm469 = vcmask 523264
          %470 = vst.msk [vmem:[#allocation2] sm:$0xff] %vm469, %v466
        $region68: #{tpu_custom_call.1} parent=47 // pred_fallthru
          _
        %v471 = vld [vmem:[%s380] sm:$0xff]
        %v472 = vld [vmem:[#allocation6] sm:$0xff]
        %v473 = vld [vmem:[#allocation6 + $0x8] sm:$0xff]
        %v474 = vld [vmem:[#allocation2] sm:$0xff]
        %vm475 = vcmask 130048
        %v477 = vsel %vm475, %v471, 0
        %479 = vmatprep.subr.mxu0 0.0
        %480 = vmatpush1.msra.mxu0 %v472
        %481 = vmatprep.subr.mxu0 0.0
        %482 = vmatpush1.msra.mxu0 %v473
        %483 = vmatprep.subr.mxu0 0.0
        %484 = vmatpush1.msra.mxu0 0.0
        %485 = vmatprep.subr.mxu0 0.0
        %486 = vmatpush1.msra.mxu0 0.0
        %487 = vmatprep.subr.mxu0 0.0
        %488 = vmatpush1.msra.mxu0 0.0
        %489 = vmatprep.subr.mxu0 0.0
        %490 = vmatpush1.msra.mxu0 0.0
        %491 = vmatprep.subr.mxu0 0.0
        %492 = vmatpush1.msra.mxu0 0.0
        %493 = vmatprep.subr.mxu0 0.0
        %494 = vmatpush1.msra.mxu0 0.0
        %495 = vmatprep.subr.mxu0 0.0
        %496 = vmatpush1.msra.mxu0 0.0
        %497 = vmatprep.subr.mxu0 0.0
        %498 = vmatpush1.msra.mxu0 0.0
        %499 = vmatprep.subr.mxu0 0.0
        %500 = vmatpush1.msra.mxu0 0.0
        %501 = vmatprep.subr.mxu0 0.0
        %502 = vmatpush1.msra.mxu0 0.0
        %503 = vmatprep.subr.mxu0 0.0
        %504 = vmatpush1.msra.mxu0 0.0
        %505 = vmatprep.subr.mxu0 0.0
        %506 = vmatpush1.msra.mxu0 0.0
        %507 = vmatprep.subr.mxu0 0.0
        %508 = vmatpush1.msra.mxu0 0.0
        %509 = vmatprep.subr.mxu0 0.0
        %510 = vmatpush1.msra.mxu0 0.0
        %511 = vmatprep.subr.mxu0 0.0
        %512 = vmatpush1.msra.mxu0 0.0
        %513 = vmatprep.subr.mxu0 0.0
        %514 = vmatpush1.msra.mxu0 0.0
        %515 = vmatprep.subr.mxu0 0.0
        %516 = vmatpush1.msra.mxu0 0.0
        %517 = vmatprep.subr.mxu0 0.0
        %518 = vmatpush1.msra.mxu0 0.0
        %519 = vmatprep.subr.mxu0 0.0
        %520 = vmatpush1.msra.mxu0 0.0
        %521 = vmatprep.subr.mxu0 0.0
        %522 = vmatpush1.msra.mxu0 0.0
        %523 = vmatprep.subr.mxu0 0.0
        %524 = vmatpush1.msra.mxu0 0.0
        %525 = vmatprep.subr.mxu0 0.0
        %526 = vmatpush1.msra.mxu0 0.0
        %527 = vmatprep.subr.mxu0 0.0
        %528 = vmatpush1.msra.mxu0 0.0
        %529 = vmatprep.subr.mxu0 0.0
        %530 = vmatpush1.msra.mxu0 0.0
        %531 = vmatprep.subr.mxu0 0.0
        %532 = vmatpush1.msra.mxu0 0.0
        %533 = vmatprep.subr.mxu0 0.0
        %534 = vmatpush1.msra.mxu0 0.0
        %535 = vmatprep.subr.mxu0 0.0
        %536 = vmatpush1.msra.mxu0 0.0
        %537 = vmatprep.subr.mxu0 0.0
        %538 = vmatpush1.msra.mxu0 0.0
        %539 = vmatprep.subr.mxu0 0.0
        %540 = vmatpush1.msra.mxu0 0.0
        %541 = vmatprep.subr.mxu0 0.0
        %542 = vmatpush1.msra.mxu0 0.0
        %543 = vmatprep.mubr.f32.mxu0 0.0
        %544 = vmatmul.mubr.f32.gmra.mrb[0].mxu0 %v477
        %v545 = vpop.f32.mrb[0].mxu0
        %v546 = vadd.f32 %v474, %v545
        %v547 = vpop.f32.mrb[0].mxu0
        %548 = vdwg.mxu0
        %v549 = vlaneseq
        %v550 = vshrl.u32 %v549, 7
        %v551 = vsub.s32 0, %v550
        %v552 = vrot.slane %v385, %v551
        %v553 = vadd.f32 %v546, %v552
        %vm554 = vcmask 261120
        %v555 = vsel %vm554, %v553, 0.0
        %556 = vadd.xlane.f32.xlu0 %v555
        %v557 = vpop.xlane.xlu0 %556
        %v558 = vrcp.pop 32.0
        %v559 = vmul.f32 %v557, %v558
        %v560 = vsub.f32 %v553, %v559
        %v561 = vmul.f32 %v560, %v560
        %v562 = vsel %vm554, %v561, 0.0
        %563 = vadd.xlane.f32.xlu0 %v562
        %v564 = vpop.xlane.xlu0 %563
        %v565 = vmul.f32 %v564, %v558
        %v566 = vadd.f32 %v565, 1e-05
        %v567 = vrsqrt.pop %v566
        %v568 = vmul.f32 %v560, %v567
        %570 = vrot.lane.b32.xlu0 %v553, 96
        %v571 = vpop.permute.xlu0 %570
        %v573 = vsel %vm554, %v571, 0.0
        %574 = vadd.xlane.f32.xlu0 %v573
        %v575 = vpop.xlane.xlu0 %574
        %v576 = vmul.f32 %v575, %v558
        %v577 = vsub.f32 %v553, %v576
        %v578 = vmul.f32 %v577, %v577
        %580 = vrot.lane.b32.xlu0 %v578, 96
        %v581 = vpop.permute.xlu0 %580
        %v583 = vsel %vm554, %v581, 0.0
        %584 = vadd.xlane.f32.xlu0 %v583
        %v585 = vpop.xlane.xlu0 %584
        %v586 = vmul.f32 %v585, %v558
        %v587 = vadd.f32 %v586, 1e-05
        %v588 = vrsqrt.pop %v587
        %v589 = vmul.f32 %v577, %v588
        %v590 = vsel %vm554, %v568, %v589
        %v591 = vlaneseq
        %v592 = vshrl.u32 %v591, 7
        %v593 = vsub.s32 1, %v592
        %v594 = vrot.slane %v385, %v593
        %v595 = vmul.f32 %v590, %v594
        %v596 = vlaneseq
        %v597 = vshrl.u32 %v596, 7
        %v598 = vsub.s32 2, %v597
        %v599 = vrot.slane %v385, %v598
        %v600 = vadd.f32 %v595, %v599
        %v601 = vmax.f32 %v600, 0.0
        %v602 = vld [vmem:[#allocation8] sm:$0xff]
        %v603 = vld [vmem:[#allocation8 + $0x8] sm:$0xff]
        %v604 = vld [vmem:[#allocation8 + $0x10] sm:$0xff]
        %v605 = vld [vmem:[#allocation8 + $0x18] sm:$0xff]
        %v606 = vld [vmem:[#allocation8 + $0x20] sm:$0xff]
        %v607 = vld [vmem:[#allocation8 + $0x28] sm:$0xff]
        %v608 = vld [vmem:[#allocation8 + $0x30] sm:$0xff]
        %v609 = vld [vmem:[#allocation8 + $0x38] sm:$0xff]
        %v610 = vlaneseq
        %v611 = vshrl.u32 %v610, 7
        %v612 = vsub.s32 3, %v611
        %v613 = vrot.slane %v385, %v612
        %vm614 = vcmask 523264
        %v616 = vsel %vm614, %v601, 0
        %618 = vmatprep.subr.mxu0 0.0
        %619 = vmatpush1.msra.mxu0 %v602
        %620 = vmatprep.subr.mxu0 0.0
        %621 = vmatpush1.msra.mxu0 %v603
        %622 = vmatprep.subr.mxu0 0.0
        %623 = vmatpush1.msra.mxu0 %v604
        %624 = vmatprep.subr.mxu0 0.0
        %625 = vmatpush1.msra.mxu0 %v605
        %626 = vmatprep.subr.mxu0 0.0
        %627 = vmatpush1.msra.mxu0 %v606
        %628 = vmatprep.subr.mxu0 0.0
        %629 = vmatpush1.msra.mxu0 %v607
        %630 = vmatprep.subr.mxu0 0.0
        %631 = vmatpush1.msra.mxu0 %v608
        %632 = vmatprep.subr.mxu0 0.0
        %633 = vmatpush1.msra.mxu0 %v609
        %634 = vmatprep.subr.mxu0 0.0
        %635 = vmatpush1.msra.mxu0 0.0
        %636 = vmatprep.subr.mxu0 0.0
        %637 = vmatpush1.msra.mxu0 0.0
        %638 = vmatprep.subr.mxu0 0.0
        %639 = vmatpush1.msra.mxu0 0.0
        %640 = vmatprep.subr.mxu0 0.0
        %641 = vmatpush1.msra.mxu0 0.0
        %642 = vmatprep.subr.mxu0 0.0
        %643 = vmatpush1.msra.mxu0 0.0
        %644 = vmatprep.subr.mxu0 0.0
        %645 = vmatpush1.msra.mxu0 0.0
        %646 = vmatprep.subr.mxu0 0.0
        %647 = vmatpush1.msra.mxu0 0.0
        %648 = vmatprep.subr.mxu0 0.0
        %649 = vmatpush1.msra.mxu0 0.0
        %650 = vmatprep.subr.mxu0 0.0
        %651 = vmatpush1.msra.mxu0 0.0
        %652 = vmatprep.subr.mxu0 0.0
        %653 = vmatpush1.msra.mxu0 0.0
        %654 = vmatprep.subr.mxu0 0.0
        %655 = vmatpush1.msra.mxu0 0.0
        %656 = vmatprep.subr.mxu0 0.0
        %657 = vmatpush1.msra.mxu0 0.0
        %658 = vmatprep.subr.mxu0 0.0
        %659 = vmatpush1.msra.mxu0 0.0
        %660 = vmatprep.subr.mxu0 0.0
        %661 = vmatpush1.msra.mxu0 0.0
        %662 = vmatprep.subr.mxu0 0.0
        %663 = vmatpush1.msra.mxu0 0.0
        %664 = vmatprep.subr.mxu0 0.0
        %665 = vmatpush1.msra.mxu0 0.0
        %666 = vmatprep.subr.mxu0 0.0
        %667 = vmatpush1.msra.mxu0 0.0
        %668 = vmatprep.subr.mxu0 0.0
        %669 = vmatpush1.msra.mxu0 0.0
        %670 = vmatprep.subr.mxu0 0.0
        %671 = vmatpush1.msra.mxu0 0.0
        %672 = vmatprep.subr.mxu0 0.0
        %673 = vmatpush1.msra.mxu0 0.0
        %674 = vmatprep.subr.mxu0 0.0
        %675 = vmatpush1.msra.mxu0 0.0
        %676 = vmatprep.subr.mxu0 0.0
        %677 = vmatpush1.msra.mxu0 0.0
        %678 = vmatprep.subr.mxu0 0.0
        %679 = vmatpush1.msra.mxu0 0.0
        %680 = vmatprep.subr.mxu0 0.0
        %681 = vmatpush1.msra.mxu0 0.0
        %682 = vmatprep.mubr.f32.mxu0 0.0
        %683 = vmatmul.mubr.f32.gmra.mrb[0].mxu0 %v616
        %v684 = vpop.f32.mrb[0].mxu0
        %v685 = vadd.f32 %v613, %v684
        %v686 = vpop.f32.mrb[0].mxu0
        %687 = vdwg.mxu0
        %v688 = vsel %vm554, %v685, 0.0
        %689 = vadd.xlane.f32.xlu0 %v688
        %v690 = vpop.xlane.xlu0 %689
        %v691 = vmul.f32 %v690, %v558
        %v692 = vsub.f32 %v685, %v691
        %v693 = vmul.f32 %v692, %v692
        %v694 = vsel %vm554, %v693, 0.0
        %695 = vadd.xlane.f32.xlu0 %v694
        %v696 = vpop.xlane.xlu0 %695
        %v697 = vmul.f32 %v696, %v558
        %v698 = vadd.f32 %v697, 1e-05
        %v699 = vrsqrt.pop %v698
        %v700 = vmul.f32 %v692, %v699
        %702 = vrot.lane.b32.xlu0 %v685, 96
        %v703 = vpop.permute.xlu0 %702
        %v705 = vsel %vm554, %v703, 0.0
        %706 = vadd.xlane.f32.xlu0 %v705
        %v707 = vpop.xlane.xlu0 %706
        %v708 = vmul.f32 %v707, %v558
        %v709 = vsub.f32 %v685, %v708
        %v710 = vmul.f32 %v709, %v709
        %712 = vrot.lane.b32.xlu0 %v710, 96
        %v713 = vpop.permute.xlu0 %712
        %v715 = vsel %vm554, %v713, 0.0
        %716 = vadd.xlane.f32.xlu0 %v715
        %v717 = vpop.xlane.xlu0 %716
        %v718 = vmul.f32 %v717, %v558
        %v719 = vadd.f32 %v718, 1e-05
        %v720 = vrsqrt.pop %v719
        %v721 = vmul.f32 %v709, %v720
        %722 = vrot.lane.b32.xlu0 %v685, 64
        %v723 = vpop.permute.xlu0 %722
        %v725 = vsel %vm554, %v723, 0.0
        %726 = vadd.xlane.f32.xlu0 %v725
        %v727 = vpop.xlane.xlu0 %726
        %v728 = vmul.f32 %v727, %v558
        %v729 = vsub.f32 %v685, %v728
        %v730 = vmul.f32 %v729, %v729
        %732 = vrot.lane.b32.xlu0 %v730, 64
        %v733 = vpop.permute.xlu0 %732
        %v735 = vsel %vm554, %v733, 0.0
        %736 = vadd.xlane.f32.xlu0 %v735
        %v737 = vpop.xlane.xlu0 %736
        %v738 = vmul.f32 %v737, %v558
        %v739 = vadd.f32 %v738, 1e-05
        %v740 = vrsqrt.pop %v739
        %v741 = vmul.f32 %v729, %v740
        %v742 = vsel %vm554, %v700, %v721
        %v743 = vsel %vm614, %v742, %v741
        %v744 = vlaneseq
        %v745 = vshrl.u32 %v744, 7
        %v746 = vsub.s32 4, %v745
        %v747 = vrot.slane %v385, %v746
        %v748 = vmul.f32 %v743, %v747
        %v749 = vlaneseq
        %v750 = vshrl.u32 %v749, 7
        %v751 = vsub.s32 5, %v750
        %v752 = vrot.slane %v385, %v751
        %v753 = vadd.f32 %v748, %v752
        %v754 = vmax.f32 %v753, 0.0
        %v755 = vld [vmem:[%s5] sm:$0xff]
        %v756 = vld [vmem:[%s5 + $0x8] sm:$0xff]
        %v757 = vld [vmem:[%s5 + $0x10] sm:$0xff]
        %v758 = vld [vmem:[%s5 + $0x18] sm:$0xff]
        %v759 = vld [vmem:[%s5 + $0x20] sm:$0xff]
        %v760 = vld [vmem:[%s5 + $0x28] sm:$0xff]
        %v761 = vld [vmem:[%s5 + $0x30] sm:$0xff]
        %v762 = vld [vmem:[%s5 + $0x38] sm:$0xff]
        %v763 = vld [vmem:[%s5 + $0x40] sm:$0xff]
        %v764 = vld [vmem:[%s5 + $0x48] sm:$0xff]
        %v765 = vld [vmem:[%s5 + $0x50] sm:$0xff]
        %v766 = vld [vmem:[%s5 + $0x58] sm:$0xff]
        %v767 = vlaneseq
        %v768 = vshrl.u32 %v767, 7
        %v769 = vsub.s32 6, %v768
        %v770 = vrot.slane %v385, %v769
        %vm771 = vcmask 785408
        %v773 = vsel %vm771, %v754, 0
        %775 = vmatprep.subr.mxu0 0.0
        %776 = vmatpush1.msra.mxu0 %v755
        %777 = vmatprep.subr.mxu0 0.0
        %778 = vmatpush1.msra.mxu0 %v756
        %779 = vmatprep.subr.mxu0 0.0
        %780 = vmatpush1.msra.mxu0 %v757
        %781 = vmatprep.subr.mxu0 0.0
        %782 = vmatpush1.msra.mxu0 %v758
        %783 = vmatprep.subr.mxu0 0.0
        %784 = vmatpush1.msra.mxu0 %v759
        %785 = vmatprep.subr.mxu0 0.0
        %786 = vmatpush1.msra.mxu0 %v760
        %787 = vmatprep.subr.mxu0 0.0
        %788 = vmatpush1.msra.mxu0 %v761
        %789 = vmatprep.subr.mxu0 0.0
        %790 = vmatpush1.msra.mxu0 %v762
        %791 = vmatprep.subr.mxu0 0.0
        %792 = vmatpush1.msra.mxu0 %v763
        %793 = vmatprep.subr.mxu0 0.0
        %794 = vmatpush1.msra.mxu0 %v764
        %795 = vmatprep.subr.mxu0 0.0
        %796 = vmatpush1.msra.mxu0 %v765
        %797 = vmatprep.subr.mxu0 0.0
        %798 = vmatpush1.msra.mxu0 %v766
        %799 = vmatprep.subr.mxu0 0.0
        %800 = vmatpush1.msra.mxu0 0.0
        %801 = vmatprep.subr.mxu0 0.0
        %802 = vmatpush1.msra.mxu0 0.0
        %803 = vmatprep.subr.mxu0 0.0
        %804 = vmatpush1.msra.mxu0 0.0
        %805 = vmatprep.subr.mxu0 0.0
        %806 = vmatpush1.msra.mxu0 0.0
        %807 = vmatprep.subr.mxu0 0.0
        %808 = vmatpush1.msra.mxu0 0.0
        %809 = vmatprep.subr.mxu0 0.0
        %810 = vmatpush1.msra.mxu0 0.0
        %811 = vmatprep.subr.mxu0 0.0
        %812 = vmatpush1.msra.mxu0 0.0
        %813 = vmatprep.subr.mxu0 0.0
        %814 = vmatpush1.msra.mxu0 0.0
        %815 = vmatprep.subr.mxu0 0.0
        %816 = vmatpush1.msra.mxu0 0.0
        %817 = vmatprep.subr.mxu0 0.0
        %818 = vmatpush1.msra.mxu0 0.0
        %819 = vmatprep.subr.mxu0 0.0
        %820 = vmatpush1.msra.mxu0 0.0
        %821 = vmatprep.subr.mxu0 0.0
        %822 = vmatpush1.msra.mxu0 0.0
        %823 = vmatprep.subr.mxu0 0.0
        %824 = vmatpush1.msra.mxu0 0.0
        %825 = vmatprep.subr.mxu0 0.0
        %826 = vmatpush1.msra.mxu0 0.0
        %827 = vmatprep.subr.mxu0 0.0
        %828 = vmatpush1.msra.mxu0 0.0
        %829 = vmatprep.subr.mxu0 0.0
        %830 = vmatpush1.msra.mxu0 0.0
        %831 = vmatprep.subr.mxu0 0.0
        %832 = vmatpush1.msra.mxu0 0.0
        %833 = vmatprep.subr.mxu0 0.0
        %834 = vmatpush1.msra.mxu0 0.0
        %835 = vmatprep.subr.mxu0 0.0
        %836 = vmatpush1.msra.mxu0 0.0
        %837 = vmatprep.subr.mxu0 0.0
        %838 = vmatpush1.msra.mxu0 0.0
        %839 = vmatprep.mubr.f32.mxu0 0.0
        %840 = vmatmul.mubr.f32.gmra.mrb[0].mxu0 %v773
        %v841 = vpop.f32.mrb[0].mxu0
        %v842 = vadd.f32 %v770, %v841
        %v843 = vpop.f32.mrb[0].mxu0
        %844 = vdwg.mxu0
        %vm845 = vcmp.gt.f32.partialorder %v842, 0.0
        %v846 = vmin.f32 %v842, 0.0
        %v847 = vmul.f32 %v846, 1.442695
        %v848 = vpow.pop %v847
        %v849 = vsub.f32 %v848, 1.0
        %v850 = vsel %vm845, %v842, %v849
        %vm851 = vcmp.gt.f32.partialorder %v385, 0.5
        %v852 = vadd.f32 %v850, 1.001
        %v853 = vsel %vm851, 1, 0
        %v854 = vlaneseq
        %v855 = vshrl.u32 %v854, 7
        %v856 = vsub.s32 7, %v855
        %v857 = vrot.slane %v853, %v856
        %vm858 = vcmp.eq.s32.totalorder %v857, 1
        %v859 = vsel %vm858, %v852, %v842
        %860 = vst [vmem:[%s374] sm:$0xff] %v859
        %s861 = sand.u32 %s211, 1
        %s862 = scalar_lea.sflag [#allocation5], %s861
        %s863 = sand.u32 %s211, 1
        %s864 = smul.addr %s863, 8
        %s865 = scalar_lea.vmem [#allocation11], %s864
        // Predicated region
        $region69: #{tpu_custom_call.1} parent=47 // pred_check
          %p866 = pneg %p221
        $region70: #{tpu_custom_call.1} parent=47 // pred_check_branch
          %868 = sbr.rel (%p866) target = $region72
        $region71: #{tpu_custom_call.1} parent=47 // pred_region
          %s869 = smul.u32 %s31, 2
          %s870 = sadd.s32 %s869, %s30
          %s872 = ssub.s32 128, 128
          %873 = vsyncadd %s862, %s872
          %s874 = smul.addr %s870, 128
          %s875 = scalar_lea.hbm %s7, %s874
          %s877 = sshll.u32 %s865, 4
          %s878 = int_to_ptr.vmem [resolvable:$true] %s877
          %880 = dma.vmem_to_hbm [thread:$0]  %s878, 128, %s875, %s862
        $region72: #{tpu_custom_call.1} parent=47 // pred_fallthru
          _
      $region48: #{tpu_custom_call.1} parent=5 // pred_fallthru
        _
      %p881 = scmp.le.s32.totalorder 2, %s21
      // Predicated region
      $region73: #{tpu_custom_call.1} parent=5 // pred_check
        %p882 = pneg %p881
      $region74: #{tpu_custom_call.1} parent=5 // pred_check_branch
        %884 = sbr.rel (%p882) target = $region76
      $region75: #{tpu_custom_call.1} parent=5 // pred_region
        %s885 = ssub.s32 %s21, 2
        // Predicated region
        $region77: #{tpu_custom_call.1} parent=75 // pred_check
          %p886 = pneg %p227
        $region78: #{tpu_custom_call.1} parent=75 // pred_check_branch
          %888 = sbr.rel (%p886) target = $region80
        $region79: #{tpu_custom_call.1} parent=75 // pred_region
          %s889 = sand.u32 %s212, 1
          %s890 = scalar_lea.sflag [#allocation5], %s889
          %s891 = sand.u32 %s212, 1
          %s892 = smul.addr %s891, 8
          %s893 = scalar_lea.vmem [#allocation11], %s892
          %894 = dma.done %s890, 128
        $region80: #{tpu_custom_call.1} parent=75 // pred_fallthru
          _
      $region76: #{tpu_custom_call.1} parent=5 // pred_fallthru
        _
    $region6: #{tpu_custom_call.1} parent=1 // loop_footer
      %s25 = sadd.s32 1, %s21
    $region7: #{tpu_custom_call.1} parent=1 // loop_footer_branch
      %20 = sbr.rel target = $region3
    $region8: #{tpu_custom_call.1} parent=1 // loop_exit
      _
    %895 = vsyncpa [#allocation4], 1
    %s896 = scalar_lea.sflag [#allocation4], 1
    %897 = vsyncpa %s896, 1
    %898 = vsyncpa [#allocation7], 1
    %899 = vsyncpa [#allocation10], 1
    %900 = vsyncpa [#allocation5], 1
    %s901 = scalar_lea.sflag [#allocation5], 1
    %902 = vsyncpa %s901, 1

</llo_original>
